<compile_context>
chip_gen: v5e
topology: v5e:2x2
jax: 0.10.0
libtpu: 0.0.40
codegen_flags: <defaults>
</compile_context>

<pallas_src>
import functools

import jax
import jax.numpy as jnp
from jax.experimental import pallas as pl
from jax.experimental.pallas import tpu as pltpu


# --------------------------------------------------------------------------- #
# Kernel
# --------------------------------------------------------------------------- #
def _scorer_kernel(t1_ref, l1_ref, ha_ref, hb_ref, b2_ref, w1c_ref, w2_ref,
                   out_ref):
    """One (batch b, token-tile i, hidden-chunk c) grid step.

    t1_ref : (1, TL, H)      second half of the token projection (compute dtype)
    l1_ref : (1, C,  H)      second half of the label projection (compute dtype)
    ha_ref : (1, TL, ch)     hoisted  t0 @ W1[:H]            (f32)
    hb_ref : (1, C,  ch)     hoisted  l0 @ W1[H:2H] + b1     (f32)
    b2_ref : (1, 3)          final output bias               (f32)
    w1c_ref: (H, ch)         W1[2H:] hidden-chunk            (compute dtype)
    w2_ref : (ch, 3)         W2 hidden-chunk                 (compute dtype)
    out_ref: (1, 1, TL*C, 3) f32 output block, resident across the chunk axis
    """
    c = pl.program_id(2)

    t1 = t1_ref[0]                       # (TL, H)
    l1 = l1_ref[0]                       # (C,  H)
    TL, H = t1.shape
    C = l1.shape[0]
    ch = w1c_ref.shape[1]

    # Element-wise product term of the concat (cheap VPU work, recomputed per
    # hidden chunk; negligible vs the chunk matmul).
    prod = (t1[:, None, :] * l1[None, :, :]).reshape(TL * C, H)

    # Dominant MXU matmul: (TL*C, H) @ (H, ch) with f32 accumulation.
    hc = jnp.dot(prod, w1c_ref[...], preferred_element_type=jnp.float32)

    # f32 epilogue (VPU-friendly on v5e too): add hoisted token/label
    # contributions (+b1 already folded into hb), then ReLU.
    # Dropout is identity in eval mode.
    h = hc.reshape(TL, C, ch) + ha_ref[0][:, None, :] + hb_ref[0][None, :, :]
    h = jnp.maximum(h, 0.0).reshape(TL * C, ch)

    # Final projection chunk: (TL*C, ch) @ (ch, 3).  LHS streams natively
    # through the MXU (no transposed operand, no XLU transpose of h).
    contrib = jnp.dot(h.astype(w2_ref.dtype), w2_ref[...],
                      preferred_element_type=jnp.float32)        # (TL*C, 3)

    @pl.when(c == 0)
    def _init():
        # Fold the tiny (3,) output bias into the accumulator init.
        out_ref[...] = jnp.broadcast_to(
            b2_ref[...].reshape(1, 1, 1, 3), out_ref.shape)

    out_ref[...] += contrib.reshape(out_ref.shape)


# --------------------------------------------------------------------------- #
# Tiling / VMEM helpers
# --------------------------------------------------------------------------- #
def _round_up(x, m):
    return ((x + m - 1) // m) * m


def _vmem_capacity_bytes():
    try:
        return int(pltpu.get_tpu_info().vmem_capacity_bytes)
    except Exception:
        return 64 * 1024 * 1024          # conservative default (v7x per-core)


def _pick_chunk(h4, target=512):
    """Largest 128-multiple divisor of 4H that is <= target, else 4H itself."""
    if h4 <= target:
        return h4
    for m in range(target, 127, -128):
        if h4 % m == 0:
            return m
    return h4


def _pick_tile_l(lp, cp, h, chunk, cdt_size, vmem_cap, batch):
    """Largest sublane-aligned divisor of Lp keeping the per-step footprint in
    budget (generation-aware)."""
    # per (TL*C) row: hc + summed h (f32), h cast (cdt), prod (cdt), padded out block
    per_row = chunk * (8 + cdt_size) + h * cdt_size + 1024
    budget = max(4 << 20, vmem_cap // 5)
    max_rows = max(8 * cp, budget // per_row)
    cands = [d for d in range(8, lp + 1, 8) if lp % d == 0]   # Lp is a mult of 8
    fitting = [d for d in cands if d * cp <= max_rows]
    tile_l = max(fitting) if fitting else min(cands)
    # v7x has 2 TensorCores/chip: keep batch * num_token_tiles >= 2 if possible.
    if batch == 1 and tile_l == lp:
        smaller = [d for d in fitting if d < lp]
        if smaller:
            tile_l = max(smaller)
    return tile_l


def _estimate_vmem_bytes(tile_l, cp, h, chunk, cdt_size):
    rows = tile_l * cp
    f32 = 4
    dbuf = 2  # double-buffered pipeline blocks
    blocks = dbuf * (
        tile_l * h * cdt_size          # t1 block
        + cp * h * cdt_size            # l1 block
        + tile_l * chunk * f32         # ha block
        + cp * chunk * f32             # hb block
        + 8 * 128 * f32                # b2 (padded tile)
        + h * chunk * cdt_size         # w1c chunk
        + chunk * 128 * cdt_size       # w2 chunk (lane-padded 3 -> 128)
        + rows * 128 * f32             # out block (lane-padded 3 -> 128)
    )
    temps = rows * (chunk * (2 * f32 + cdt_size) + h * cdt_size + 128 * f32)
    return blocks + temps


# --------------------------------------------------------------------------- #
# Wrapper
# --------------------------------------------------------------------------- #
def scorer_forward(token_rep, label_rep, params, *, tile_l=None, chunk=None,
                   compute_dtype=jnp.bfloat16):
    """token_rep: (B, L, H), label_rep: (B, C, H)  ->  (B, L, C, 3) float32."""
    B, L, H = token_rep.shape
    C = label_rep.shape[1]
    H4 = 4 * H
    cdt = jnp.dtype(compute_dtype)
    f32 = jnp.float32

    wt, bt = params["wt"], params["bt"]
    wl, bl = params["wl"], params["bl"]
    w1, b1 = params["w1"], params["b1"]
    w2, b2 = params["w2"], params["b2"]

    # ---- hoisted projections (plain XLA, computed exactly once) ------------
    tp = token_rep.astype(f32) @ wt.astype(f32) + bt.astype(f32)     # (B, L, 2H)
    lp = label_rep.astype(f32) @ wl.astype(f32) + bl.astype(f32)     # (B, C, 2H)
    t0, t1 = tp[..., :H], tp[..., H:]
    l0, l1 = lp[..., :H], lp[..., H:]
    w1a, w1b, w1c = w1[:H], w1[H:2 * H], w1[2 * H:]
    ha = t0 @ w1a.astype(f32)                         # (B, L, 4H) f32 (per b, token)
    hb = l0 @ w1b.astype(f32) + b1.astype(f32)        # (B, C, 4H) f32 (per b, class)

    t1 = t1.astype(cdt)
    l1 = l1.astype(cdt)
    w1c_c = w1c.astype(cdt)
    w2_c = w2.astype(cdt)
    b2_2d = b2.reshape(1, 3).astype(f32)

    # ---- pad class / sequence axes to sublane-friendly sizes ---------------
    Cp = _round_up(C, 8)
    Lp = _round_up(L, 8)
    if Cp != C:
        l1 = jnp.pad(l1, ((0, 0), (0, Cp - C), (0, 0)))
        hb = jnp.pad(hb, ((0, 0), (0, Cp - C), (0, 0)))
    if Lp != L:
        t1 = jnp.pad(t1, ((0, 0), (0, Lp - L), (0, 0)))
        ha = jnp.pad(ha, ((0, 0), (0, Lp - L), (0, 0)))

    # ---- tiling decisions (generation-aware) --------------------------------
    vmem_cap = _vmem_capacity_bytes()
    if chunk is None:
        chunk = _pick_chunk(H4)
    assert H4 % chunk == 0, "hidden chunk must divide 4*hidden_size"
    if tile_l is None:
        tile_l = _pick_tile_l(Lp, Cp, H, chunk, cdt.itemsize, vmem_cap, B)
    assert Lp % tile_l == 0, "tile_l must divide the (padded) seq length"
    assert tile_l % 8 == 0 or tile_l == Lp, "tile_l must be sublane aligned"
    nI = Lp // tile_l
    nC = H4 // chunk
    rows = tile_l * Cp

    est = _estimate_vmem_bytes(tile_l, Cp, H, chunk, cdt.itemsize)
    vmem_limit = int(min(max(2 * est, 48 << 20), int(0.9 * vmem_cap)))

    grid_spec = pltpu.PrefetchScalarGridSpec(
        num_scalar_prefetch=0,
        grid=(B, nI, nC),
        in_specs=[
            pl.BlockSpec((1, tile_l, H),     lambda b, i, c: (b, i, 0)),  # t1
            pl.BlockSpec((1, Cp, H),         lambda b, i, c: (b, 0, 0)),  # l1
            pl.BlockSpec((1, tile_l, chunk), lambda b, i, c: (b, i, c)),  # ha
            pl.BlockSpec((1, Cp, chunk),     lambda b, i, c: (b, 0, c)),  # hb
            pl.BlockSpec((1, 3),             lambda b, i, c: (0, 0)),     # b2
            pl.BlockSpec((H, chunk),         lambda b, i, c: (0, c)),     # w1c
            pl.BlockSpec((chunk, 3),         lambda b, i, c: (c, 0)),     # w2
        ],
        out_specs=pl.BlockSpec((1, 1, rows, 3), lambda b, i, c: (b, i, 0, 0)),
    )

    out = pl.pallas_call(
        _scorer_kernel,
        out_shape=jax.ShapeDtypeStruct((B, nI, rows, 3), jnp.float32),
        grid_spec=grid_spec,
        compiler_params=pltpu.CompilerParams(
            dimension_semantics=("parallel", "parallel", "arbitrary"),
            vmem_limit_bytes=vmem_limit),
    )(t1, l1, ha, hb, b2_2d, w1c_c, w2_c)

    # (B, nI, tile_l*Cp, 3) -> (B, Lp, Cp, 3): contiguity-preserving reshapes
    # only (no transpose, no extra HBM round trip), then drop padding.
    scores = out.reshape(B, Lp, Cp, 3)
    return scores[:, :L, :C, :]


# --------------------------------------------------------------------------- #
# Params + pure-JAX reference
# --------------------------------------------------------------------------- #
def init_params(key, hidden_size):
    H = hidden_size
    ks = jax.random.split(key, 8)
    s = 0.05
    return {
        "wt": jax.random.normal(ks[0], (H, 2 * H), jnp.float32) * s,
        "bt": jax.random.normal(ks[1], (2 * H,), jnp.float32) * s,
        "wl": jax.random.normal(ks[2], (H, 2 * H), jnp.float32) * s,
        "bl": jax.random.normal(ks[3], (2 * H,), jnp.float32) * s,
        "w1": jax.random.normal(ks[4], (3 * H, 4 * H), jnp.float32) * s,
        "b1": jax.random.normal(ks[5], (4 * H,), jnp.float32) * s,
        "w2": jax.random.normal(ks[6], (4 * H, 3), jnp.float32) * s,
        "b2": jax.random.normal(ks[7], (3,), jnp.float32) * s,
    }


def scorer_reference(token_rep, label_rep, p):
    """Pure-JAX reference mirroring the PyTorch forward (eval mode)."""
    B, L, H = token_rep.shape
    C = label_rep.shape[1]
    tp = token_rep @ p["wt"] + p["bt"]            # (B, L, 2H)
    lp = label_rep @ p["wl"] + p["bl"]            # (B, C, 2H)
    t0, t1 = tp[..., :H], tp[..., H:]
    l0, l1 = lp[..., :H], lp[..., H:]
    t0 = jnp.broadcast_to(t0[:, :, None, :], (B, L, C, H))
    l0 = jnp.broadcast_to(l0[:, None, :, :], (B, L, C, H))
    prod = t1[:, :, None, :] * l1[:, None, :, :]
    cat = jnp.concatenate([t0, l0, prod], axis=-1)               # (B, L, C, 3H)
    h = jnp.maximum(cat @ p["w1"] + p["b1"], 0.0)
    return h @ p["w2"] + p["b2"]                                  # (B, L, C, 3)


# --------------------------------------------------------------------------- #
# Smoke test
# --------------------------------------------------------------------------- #
if __name__ == "__main__":
    B, L, C, H = 2, 16, 8, 32
    key = jax.random.PRNGKey(0)
    k_tok, k_lab, k_par = jax.random.split(key, 3)

    token_rep = jax.random.normal(k_tok, (B, L, H), jnp.float32)
    label_rep = jax.random.normal(k_lab, (B, C, H), jnp.float32)
    params = init_params(k_par, H)

    ref = scorer_reference(token_rep, label_rep, params)

    # f32 compute path (tight-ish check).
    fwd_f32 = jax.jit(functools.partial(scorer_forward, compute_dtype=jnp.float32))
    out_f32 = jax.block_until_ready(fwd_f32(token_rep, label_rep, params))
    assert out_f32.shape == (B, L, C, 3)
    assert jnp.allclose(out_f32, ref, atol=5e-3, rtol=5e-3), "f32 mismatch vs reference"

    # default bf16 MXU path (f32 accumulation; looser tolerance).
    fwd_bf16 = jax.jit(scorer_forward)
    out_bf16 = jax.block_until_ready(fwd_bf16(token_rep, label_rep, params))
    assert out_bf16.shape == (B, L, C, 3)
    assert jnp.allclose(out_bf16, ref, atol=5e-2, rtol=5e-2), "bf16 mismatch vs reference"

    print("KERNEL_OK")
</pallas_src>

<mosaic_0001>
module attributes {stable_mosaic.version = 11 : i64} {
  func.func @_scorer_kernel(%arg0: i32, %arg1: i32, %arg2: i32, %arg3: memref<1x16x32xf32, #tpu.memory_space<vmem>>, %arg4: memref<1x8x32xf32, #tpu.memory_space<vmem>>, %arg5: memref<1x16x128xf32, #tpu.memory_space<vmem>>, %arg6: memref<1x8x128xf32, #tpu.memory_space<vmem>>, %arg7: memref<1x3xf32, #tpu.memory_space<vmem>>, %arg8: memref<32x128xf32, #tpu.memory_space<vmem>>, %arg9: memref<128x3xf32, #tpu.memory_space<vmem>>, %arg10: memref<1x1x128x3xf32, #tpu.memory_space<vmem>>) attributes {dimension_semantics = [#tpu.dimension_semantics<parallel>, #tpu.dimension_semantics<parallel>, #tpu.dimension_semantics<arbitrary>], iteration_bounds = array<i64: 2, 1, 1>, scalar_prefetch = 0 : i64, scratch_operands = 0 : i64, tpu.core_type = #tpu.core_type<tc>, window_params = [{transform_indices = @transform_0, window_bounds = array<i64: 1, 16, 32>}, {transform_indices = @transform_1, window_bounds = array<i64: 1, 8, 32>}, {transform_indices = @transform_2, window_bounds = array<i64: 1, 16, 128>}, {transform_indices = @transform_3, window_bounds = array<i64: 1, 8, 128>}, {pipeline_mode = #tpu.pipeline_mode<synchronous>, transform_indices = @transform_4, window_bounds = array<i64: 1, 3>}, {transform_indices = @transform_5, window_bounds = array<i64: 32, 128>}, {transform_indices = @transform_6, window_bounds = array<i64: 128, 3>}, {transform_indices = @transform_7, window_bounds = array<i64: 1, 1, 128, 3>}]} {
    %c0 = arith.constant 0 : index
    %c0_0 = arith.constant 0 : index
    %c0_1 = arith.constant 0 : index
    %0 = vector.load %arg3[%c0, %c0_0, %c0_1] : memref<1x16x32xf32, #tpu.memory_space<vmem>>, vector<1x16x32xf32>
    %1 = vector.shape_cast %0 : vector<1x16x32xf32> to vector<16x32xf32>
    %c0_2 = arith.constant 0 : index
    %c0_3 = arith.constant 0 : index
    %c0_4 = arith.constant 0 : index
    %2 = vector.load %arg4[%c0_2, %c0_3, %c0_4] : memref<1x8x32xf32, #tpu.memory_space<vmem>>, vector<1x8x32xf32>
    %3 = vector.shape_cast %2 : vector<1x8x32xf32> to vector<8x32xf32>
    %4 = vector.shape_cast %1 : vector<16x32xf32> to vector<16x1x32xf32>
    %5 = vector.shape_cast %3 : vector<8x32xf32> to vector<1x8x32xf32>
    %6 = vector.broadcast %4 : vector<16x1x32xf32> to vector<16x8x32xf32>
    %7 = vector.broadcast %5 : vector<1x8x32xf32> to vector<16x8x32xf32>
    %8 = arith.mulf %6, %7 : vector<16x8x32xf32>
    %9 = vector.shape_cast %8 : vector<16x8x32xf32> to vector<128x32xf32>
    %c0_5 = arith.constant 0 : index
    %c0_6 = arith.constant 0 : index
    %10 = vector.load %arg8[%c0_5, %c0_6] : memref<32x128xf32, #tpu.memory_space<vmem>>, vector<32x128xf32>
    %cst = arith.constant dense<0.000000e+00> : vector<128x128xf32>
    %11 = tpu.matmul %9, %10, %cst {dimension_numbers = #tpu.dot_dimension_numbers<[1], [0], [0], [1], [0, 0, 1, 1], [], []>} : vector<128x32xf32>, vector<32x128xf32>, vector<128x128xf32> -> vector<128x128xf32>
    %12 = vector.shape_cast %11 : vector<128x128xf32> to vector<16x8x128xf32>
    %c0_7 = arith.constant 0 : index
    %c0_8 = arith.constant 0 : index
    %c0_9 = arith.constant 0 : index
    %13 = vector.load %arg5[%c0_7, %c0_8, %c0_9] : memref<1x16x128xf32, #tpu.memory_space<vmem>>, vector<1x16x128xf32>
    %14 = vector.shape_cast %13 : vector<1x16x128xf32> to vector<16x128xf32>
    %15 = vector.shape_cast %14 : vector<16x128xf32> to vector<16x1x128xf32>
    %16 = vector.broadcast %15 : vector<16x1x128xf32> to vector<16x8x128xf32>
    %17 = arith.addf %12, %16 : vector<16x8x128xf32>
    %c0_10 = arith.constant 0 : index
    %c0_11 = arith.constant 0 : index
    %c0_12 = arith.constant 0 : index
    %18 = vector.load %arg6[%c0_10, %c0_11, %c0_12] : memref<1x8x128xf32, #tpu.memory_space<vmem>>, vector<1x8x128xf32>
    %19 = vector.shape_cast %18 : vector<1x8x128xf32> to vector<8x128xf32>
    %20 = vector.shape_cast %19 : vector<8x128xf32> to vector<1x8x128xf32>
    %21 = vector.broadcast %20 : vector<1x8x128xf32> to vector<16x8x128xf32>
    %22 = arith.addf %17, %21 : vector<16x8x128xf32>
    %cst_13 = arith.constant 0.000000e+00 : f32
    %23 = vector.broadcast %cst_13 : f32 to vector<16x8x128xf32>
    %24 = arith.maximumf %22, %23 : vector<16x8x128xf32>
    %25 = vector.shape_cast %24 : vector<16x8x128xf32> to vector<128x128xf32>
    %c0_14 = arith.constant 0 : index
    %c0_15 = arith.constant 0 : index
    %26 = vector.load %arg9[%c0_14, %c0_15] : memref<128x3xf32, #tpu.memory_space<vmem>>, vector<128x3xf32>
    %cst_16 = arith.constant dense<0.000000e+00> : vector<128x3xf32>
    %27 = tpu.matmul %25, %26, %cst_16 {dimension_numbers = #tpu.dot_dimension_numbers<[1], [0], [0], [1], [0, 0, 1, 1], [], []>} : vector<128x128xf32>, vector<128x3xf32>, vector<128x3xf32> -> vector<128x3xf32>
    %c0_i32 = arith.constant 0 : i32
    %28 = arith.cmpi eq, %arg2, %c0_i32 : i32
    %29 = arith.extui %28 : i1 to i32
    %c0_i32_17 = arith.constant 0 : i32
    %30 = arith.cmpi ne, %29, %c0_i32_17 : i32
    scf.if %30 {
      %c0_26 = arith.constant 0 : index
      %c0_27 = arith.constant 0 : index
      %35 = vector.load %arg7[%c0_26, %c0_27] : memref<1x3xf32, #tpu.memory_space<vmem>>, vector<1x3xf32>
      %36 = vector.shape_cast %35 : vector<1x3xf32> to vector<1x1x1x3xf32>
      %37 = vector.shape_cast %36 : vector<1x1x1x3xf32> to vector<1x1x1x3xf32>
      %38 = vector.broadcast %37 : vector<1x1x1x3xf32> to vector<1x1x128x3xf32>
      %c0_28 = arith.constant 0 : index
      %c0_29 = arith.constant 0 : index
      %c0_30 = arith.constant 0 : index
      %c0_31 = arith.constant 0 : index
      %39 = vector.load %arg10[%c0_28, %c0_29, %c0_30, %c0_31] : memref<1x1x128x3xf32, #tpu.memory_space<vmem>>, vector<1x1x128x3xf32>
      tpu.vector_store %arg10[%c0_28, %c0_29, %c0_30, %c0_31], %38 {strides = array<i32>} : memref<1x1x128x3xf32, #tpu.memory_space<vmem>>, vector<1x1x128x3xf32>,
    } else {
    }
    %c0_18 = arith.constant 0 : index
    %c0_19 = arith.constant 0 : index
    %c0_20 = arith.constant 0 : index
    %c0_21 = arith.constant 0 : index
    %31 = vector.load %arg10[%c0_18, %c0_19, %c0_20, %c0_21] : memref<1x1x128x3xf32, #tpu.memory_space<vmem>>, vector<1x1x128x3xf32>
    %32 = vector.shape_cast %27 : vector<128x3xf32> to vector<1x1x128x3xf32>
    %33 = arith.addf %31, %32 : vector<1x1x128x3xf32>
    %c0_22 = arith.constant 0 : index
    %c0_23 = arith.constant 0 : index
    %c0_24 = arith.constant 0 : index
    %c0_25 = arith.constant 0 : index
    %34 = vector.load %arg10[%c0_22, %c0_23, %c0_24, %c0_25] : memref<1x1x128x3xf32, #tpu.memory_space<vmem>>, vector<1x1x128x3xf32>
    tpu.vector_store %arg10[%c0_22, %c0_23, %c0_24, %c0_25], %33 {strides = array<i32>} : memref<1x1x128x3xf32, #tpu.memory_space<vmem>>, vector<1x1x128x3xf32>,
    return
  }
  func.func @transform_0(%arg0: i32, %arg1: i32, %arg2: i32) -> (i32, i32, i32) {
    %c0_i32 = arith.constant 0 : i32
    %c0_i32_0 = arith.constant 0 : i32
    return %arg0, %arg1, %c0_i32 : i32, i32, i32
  }
  func.func @transform_1(%arg0: i32, %arg1: i32, %arg2: i32) -> (i32, i32, i32) {
    %c0_i32 = arith.constant 0 : i32
    %c0_i32_0 = arith.constant 0 : i32
    %c0_i32_1 = arith.constant 0 : i32
    return %arg0, %c0_i32, %c0_i32_0 : i32, i32, i32
  }
  func.func @transform_2(%arg0: i32, %arg1: i32, %arg2: i32) -> (i32, i32, i32) {
    %c0_i32 = arith.constant 0 : i32
    return %arg0, %arg1, %arg2 : i32, i32, i32
  }
  func.func @transform_3(%arg0: i32, %arg1: i32, %arg2: i32) -> (i32, i32, i32) {
    %c0_i32 = arith.constant 0 : i32
    %c0_i32_0 = arith.constant 0 : i32
    return %arg0, %c0_i32, %arg2 : i32, i32, i32
  }
  func.func @transform_4(%arg0: i32, %arg1: i32, %arg2: i32) -> (i32, i32) {
    %c0_i32 = arith.constant 0 : i32
    %c0_i32_0 = arith.constant 0 : i32
    %c0_i32_1 = arith.constant 0 : i32
    return %c0_i32, %c0_i32_0 : i32, i32
  }
  func.func @transform_5(%arg0: i32, %arg1: i32, %arg2: i32) -> (i32, i32) {
    %c0_i32 = arith.constant 0 : i32
    %c0_i32_0 = arith.constant 0 : i32
    return %c0_i32, %arg2 : i32, i32
  }
  func.func @transform_6(%arg0: i32, %arg1: i32, %arg2: i32) -> (i32, i32) {
    %c0_i32 = arith.constant 0 : i32
    %c0_i32_0 = arith.constant 0 : i32
    return %arg2, %c0_i32 : i32, i32
  }
  func.func @transform_7(%arg0: i32, %arg1: i32, %arg2: i32) -> (i32, i32, i32, i32) {
    %c0_i32 = arith.constant 0 : i32
    %c0_i32_0 = arith.constant 0 : i32
    %c0_i32_1 = arith.constant 0 : i32
    return %arg0, %arg1, %c0_i32, %c0_i32_0 : i32, i32, i32, i32
  }
}

</mosaic_0001>

<llo_original>
// kernel: scorer_forward.1
$region0: #{scorer_forward.1}
  #allocation0 [shape = 'u32[]', space=smem, size = 0x4, offset = 0x4, fixed_abs, tag = 'smem constant byte address 0x4 - core index']
  #allocation1 [shape = 'u32[72,128]{1,0:T(1,128)}', space=vmem, size = 0x9000, scoped, tag = 'internal scratch']
  %s0 = inlined_call_operand.vmem [shape: f32[2,16,32], index: 0, kind: input, shape index: {}]
  %s1 = inlined_call_operand.vmem [shape: f32[2,8,32], index: 1, kind: input, shape index: {}]
  %s2 = inlined_call_operand.vmem [shape: f32[2,16,128], index: 2, kind: input, shape index: {}]
  %s3 = inlined_call_operand.vmem [shape: f32[2,8,128], index: 3, kind: input, shape index: {}]
  %s4 = inlined_call_operand.vmem [shape: f32[1,3], index: 4, kind: input, shape index: {}]
  %s5 = inlined_call_operand.vmem [shape: f32[32,128], index: 5, kind: input, shape index: {}]
  %s6 = inlined_call_operand.vmem [shape: f32[128,3], index: 6, kind: input, shape index: {}]
  %s7 = inlined_call_operand.vmem [shape: f32[2,1,128,3], index: 7, kind: output, shape index: {}]
  %s8 = sld [smem:[#allocation0]]
  $region65: #{scorer_forward.1} parent=0
    _
  %s10 = ssub.s32 1, %s8
  %s11 = scalar_select 0, %s10, %s8
  loop: start=0, step=1, limit=4
  $region2: #{scorer_forward.1} parent=0 // loop_pre_header
    _
  $region3: #{scorer_forward.1} parent=0 // loop_header
    %s13 = sphi 0, %s17
    %p14 = scmp.ge.s32.totalorder %s13, 4
    %s20 = sphi 0, %s39
    %s21 = sphi 0, %s35
    %s22 = sphi 0, %s31
    %s23 = sphi 0, %s20
    %s24 = sphi 0, %s21
    %s25 = sphi 0, %s22
    %s26 = sphi 0, %s23
    %s27 = sphi 0, %s24
    %s28 = sphi 0, %s25
    %s44 = sphi 0, %s46
    %s47 = sphi 0, %s44
    %s48 = sphi 0, %s47
    %s64 = sphi 0, %s48
    %s70 = sphi 0, %s72
    %s73 = sphi 0, %s70
    %s74 = sphi 0, %s73
    %s90 = sphi 0, %s74
    %s100 = sphi 0, %s102
    %s103 = sphi 0, %s100
    %s104 = sphi 0, %s103
    %s120 = sphi 0, %s104
    %s128 = sphi 0, %s130
    %s131 = sphi 0, %s128
    %s132 = sphi 0, %s131
    %s148 = sphi 0, %s132
    %s152 = sphi 0, %s152
    %s154 = sphi 0, %s152
    %s155 = sphi 0, %s154
    %s169 = sphi 0, %s155
    %s175 = sphi 0, %s177
    %s178 = sphi 0, %s175
    %s179 = sphi 0, %s178
    %s195 = sphi 0, %s179
    %s201 = sphi 0, %s203
    %s204 = sphi 0, %s201
    %s205 = sphi 0, %s204
    %s221 = sphi 0, %s205
    %s229 = sphi 0, %s231
    %s232 = sphi 0, %s229
    %s233 = sphi 0, %s232
    %s249 = sphi 0, %s233
  $region4: #{scorer_forward.1} parent=0 // loop_header_branch
    %16 = sbr.rel (%p14) target = $region8
  $region5: #{scorer_forward.1} parent=0 // loop_body
    %s18 = ssub.s32 %s13, 1
    %s19 = ssub.s32 %s13, 2
    %s29 = sadd.s32 1, %s22
    %p30 = scmp.ge.s32.totalorder %s29, 1
    %s31 = scalar_select %p30, 0, %s29
    %s32 = sadd.s32 1, %s21
    %s33 = scalar_select %p30, %s32, %s21
    %p34 = scmp.ge.s32.totalorder %s33, 1
    %s35 = scalar_select %p34, 0, %s33
    %s36 = sadd.s32 1, %s20
    %s37 = scalar_select %p34, %s36, %s20
    %p38 = scmp.ge.s32.totalorder %s37, 2
    %s39 = scalar_select %p38, 0, %s37
    %s40 = ssub.s32 %s20, %s39
    %s41 = ssub.s32 %s21, %s35
    %s42 = sor.u32 %s40, %s41
    %p43 = scmp.eq.s32.totalorder %s42, 0
    %s45 = sadd.s32 %s44, 1
    %s46 = scalar_select %p43, %s44, %s45
    %p49 = pneg %p43
    %p50 = scmp.eq.s32.totalorder %s13, 1
    %p51 = por %p49, %p50
    %p52 = scmp.ne.s32.totalorder %s44, %s47
    %p53 = scmp.eq.s32.totalorder %s13, 0
    %p54 = por %p52, %p53
    %p55 = scmp.ne.s32.totalorder %s44, %s47
    %p56 = scmp.eq.s32.totalorder %s18, 1
    %p57 = por %p55, %p56
    %p58 = scmp.ne.s32.totalorder %s47, %s48
    %p59 = scmp.eq.s32.totalorder %s18, 0
    %p60 = por %p58, %p59
    %p61 = scmp.ne.s32.totalorder %s47, %s48
    %p62 = scmp.eq.s32.totalorder %s19, 1
    %p63 = por %p61, %p62
    %p65 = scmp.ne.s32.totalorder %s48, %s64
    %p66 = scmp.eq.s32.totalorder %s19, 0
    %p67 = por %p65, %p66
    %s68 = ssub.s32 %s20, %s39
    %p69 = scmp.eq.s32.totalorder %s68, 0
    %s71 = sadd.s32 %s70, 1
    %s72 = scalar_select %p69, %s70, %s71
    %p75 = pneg %p69
    %p76 = scmp.eq.s32.totalorder %s13, 1
    %p77 = por %p75, %p76
    %p78 = scmp.ne.s32.totalorder %s70, %s73
    %p79 = scmp.eq.s32.totalorder %s13, 0
    %p80 = por %p78, %p79
    %p81 = scmp.ne.s32.totalorder %s70, %s73
    %p82 = scmp.eq.s32.totalorder %s18, 1
    %p83 = por %p81, %p82
    %p84 = scmp.ne.s32.totalorder %s73, %s74
    %p85 = scmp.eq.s32.totalorder %s18, 0
    %p86 = por %p84, %p85
    %p87 = scmp.ne.s32.totalorder %s73, %s74
    %p88 = scmp.eq.s32.totalorder %s19, 1
    %p89 = por %p87, %p88
    %p91 = scmp.ne.s32.totalorder %s74, %s90
    %p92 = scmp.eq.s32.totalorder %s19, 0
    %p93 = por %p91, %p92
    %s94 = ssub.s32 %s20, %s39
    %s95 = ssub.s32 %s21, %s35
    %s96 = sor.u32 %s94, %s95
    %s97 = ssub.s32 %s22, %s31
    %s98 = sor.u32 %s96, %s97
    %p99 = scmp.eq.s32.totalorder %s98, 0
    %s101 = sadd.s32 %s100, 1
    %s102 = scalar_select %p99, %s100, %s101
    %p105 = pneg %p99
    %p106 = scmp.eq.s32.totalorder %s13, 1
    %p107 = por %p105, %p106
    %p108 = scmp.ne.s32.totalorder %s100, %s103
    %p109 = scmp.eq.s32.totalorder %s13, 0
    %p110 = por %p108, %p109
    %p111 = scmp.ne.s32.totalorder %s100, %s103
    %p112 = scmp.eq.s32.totalorder %s18, 1
    %p113 = por %p111, %p112
    %p114 = scmp.ne.s32.totalorder %s103, %s104
    %p115 = scmp.eq.s32.totalorder %s18, 0
    %p116 = por %p114, %p115
    %p117 = scmp.ne.s32.totalorder %s103, %s104
    %p118 = scmp.eq.s32.totalorder %s19, 1
    %p119 = por %p117, %p118
    %p121 = scmp.ne.s32.totalorder %s104, %s120
    %p122 = scmp.eq.s32.totalorder %s19, 0
    %p123 = por %p121, %p122
    %s124 = ssub.s32 %s20, %s39
    %s125 = ssub.s32 %s22, %s31
    %s126 = sor.u32 %s124, %s125
    %p127 = scmp.eq.s32.totalorder %s126, 0
    %s129 = sadd.s32 %s128, 1
    %s130 = scalar_select %p127, %s128, %s129
    %p133 = pneg %p127
    %p134 = scmp.eq.s32.totalorder %s13, 1
    %p135 = por %p133, %p134
    %p136 = scmp.ne.s32.totalorder %s128, %s131
    %p137 = scmp.eq.s32.totalorder %s13, 0
    %p138 = por %p136, %p137
    %p139 = scmp.ne.s32.totalorder %s128, %s131
    %p140 = scmp.eq.s32.totalorder %s18, 1
    %p141 = por %p139, %p140
    %p142 = scmp.ne.s32.totalorder %s131, %s132
    %p143 = scmp.eq.s32.totalorder %s18, 0
    %p144 = por %p142, %p143
    %p145 = scmp.ne.s32.totalorder %s131, %s132
    %p146 = scmp.eq.s32.totalorder %s19, 1
    %p147 = por %p145, %p146
    %p149 = scmp.ne.s32.totalorder %s132, %s148
    %p150 = scmp.eq.s32.totalorder %s19, 0
    %p151 = por %p149, %p150
    %s153 = sadd.s32 %s152, 1
    %p156 = scmp.eq.s32.totalorder %s13, 1
    %p157 = scmp.ne.s32.totalorder %s152, %s154
    %p158 = scmp.eq.s32.totalorder %s13, 0
    %p159 = por %p157, %p158
    %p160 = scmp.ne.s32.totalorder %s152, %s154
    %p161 = scmp.eq.s32.totalorder %s18, 1
    %p162 = por %p160, %p161
    %p163 = scmp.ne.s32.totalorder %s154, %s155
    %p164 = scmp.eq.s32.totalorder %s18, 0
    %p165 = por %p163, %p164
    %p166 = scmp.ne.s32.totalorder %s154, %s155
    %p167 = scmp.eq.s32.totalorder %s19, 1
    %p168 = por %p166, %p167
    %p170 = scmp.ne.s32.totalorder %s155, %s169
    %p171 = scmp.eq.s32.totalorder %s19, 0
    %p172 = por %p170, %p171
    %s173 = ssub.s32 %s22, %s31
    %p174 = scmp.eq.s32.totalorder %s173, 0
    %s176 = sadd.s32 %s175, 1
    %s177 = scalar_select %p174, %s175, %s176
    %p180 = pneg %p174
    %p181 = scmp.eq.s32.totalorder %s13, 1
    %p182 = por %p180, %p181
    %p183 = scmp.ne.s32.totalorder %s175, %s178
    %p184 = scmp.eq.s32.totalorder %s13, 0
    %p185 = por %p183, %p184
    %p186 = scmp.ne.s32.totalorder %s175, %s178
    %p187 = scmp.eq.s32.totalorder %s18, 1
    %p188 = por %p186, %p187
    %p189 = scmp.ne.s32.totalorder %s178, %s179
    %p190 = scmp.eq.s32.totalorder %s18, 0
    %p191 = por %p189, %p190
    %p192 = scmp.ne.s32.totalorder %s178, %s179
    %p193 = scmp.eq.s32.totalorder %s19, 1
    %p194 = por %p192, %p193
    %p196 = scmp.ne.s32.totalorder %s179, %s195
    %p197 = scmp.eq.s32.totalorder %s19, 0
    %p198 = por %p196, %p197
    %s199 = ssub.s32 %s22, %s31
    %p200 = scmp.eq.s32.totalorder %s199, 0
    %s202 = sadd.s32 %s201, 1
    %s203 = scalar_select %p200, %s201, %s202
    %p206 = pneg %p200
    %p207 = scmp.eq.s32.totalorder %s13, 1
    %p208 = por %p206, %p207
    %p209 = scmp.ne.s32.totalorder %s201, %s204
    %p210 = scmp.eq.s32.totalorder %s13, 0
    %p211 = por %p209, %p210
    %p212 = scmp.ne.s32.totalorder %s201, %s204
    %p213 = scmp.eq.s32.totalorder %s18, 1
    %p214 = por %p212, %p213
    %p215 = scmp.ne.s32.totalorder %s204, %s205
    %p216 = scmp.eq.s32.totalorder %s18, 0
    %p217 = por %p215, %p216
    %p218 = scmp.ne.s32.totalorder %s204, %s205
    %p219 = scmp.eq.s32.totalorder %s19, 1
    %p220 = por %p218, %p219
    %p222 = scmp.ne.s32.totalorder %s205, %s221
    %p223 = scmp.eq.s32.totalorder %s19, 0
    %p224 = por %p222, %p223
    %s225 = ssub.s32 %s20, %s39
    %s226 = ssub.s32 %s21, %s35
    %s227 = sor.u32 %s225, %s226
    %p228 = scmp.eq.s32.totalorder %s227, 0
    %s230 = sadd.s32 %s229, 1
    %s231 = scalar_select %p228, %s229, %s230
    %p234 = pneg %p228
    %p235 = scmp.eq.s32.totalorder %s13, 1
    %p236 = por %p234, %p235
    %p237 = scmp.ne.s32.totalorder %s229, %s232
    %p238 = scmp.eq.s32.totalorder %s13, 0
    %p239 = por %p237, %p238
    %p240 = scmp.ne.s32.totalorder %s229, %s232
    %p241 = scmp.eq.s32.totalorder %s18, 1
    %p242 = por %p240, %p241
    %p243 = scmp.ne.s32.totalorder %s232, %s233
    %p244 = scmp.eq.s32.totalorder %s18, 0
    %p245 = por %p243, %p244
    %p246 = scmp.ne.s32.totalorder %s232, %s233
    %p247 = scmp.eq.s32.totalorder %s19, 1
    %p248 = por %p246, %p247
    %p250 = scmp.ne.s32.totalorder %s233, %s249
    %p251 = scmp.eq.s32.totalorder %s19, 0
    %p252 = por %p250, %p251
    %p253 = scmp.le.s32.totalorder 1, %s13
    %p254 = scmp.lt.s32.totalorder %s13, 3
    %p255 = pnand %p253, %p254
    %p256 = pneg %p255
    // Predicated region
    $region9: #{scorer_forward.1} parent=5 // pred_check
      _
    $region10: #{scorer_forward.1} parent=5 // pred_check_branch
      %258 = sbr.rel (%p255) target = $region12
    $region11: #{scorer_forward.1} parent=5 // pred_region
      %s259 = ssub.s32 %s13, 1
      // Predicated region
      $region13: #{scorer_forward.1} parent=11 // pred_check
        %p260 = pneg %p165
      $region14: #{scorer_forward.1} parent=11 // pred_check_branch
        %262 = sbr.rel (%p260) target = $region16
      $region15: #{scorer_forward.1} parent=11 // pred_region
        _
      $region16: #{scorer_forward.1} parent=11 // pred_fallthru
        _
      // Predicated region
      $region17: #{scorer_forward.1} parent=11 // pred_check
        %p263 = pneg %p191
      $region18: #{scorer_forward.1} parent=11 // pred_check_branch
        %265 = sbr.rel (%p263) target = $region20
      $region19: #{scorer_forward.1} parent=11 // pred_region
        %p266 = scmp.lt.s32.totalorder %s25, 0
        %s267 = scalar_select %p266, %s25, 0
        %s268 = smul.addr %s267, 8
        %s269 = scalar_lea.vmem %s5, %s268
      $region20: #{scorer_forward.1} parent=11 // pred_fallthru
        _
      // Predicated region
      $region21: #{scorer_forward.1} parent=11 // pred_check
        %p270 = pneg %p217
      $region22: #{scorer_forward.1} parent=11 // pred_check_branch
        %272 = sbr.rel (%p270) target = $region24
      $region23: #{scorer_forward.1} parent=11 // pred_region
        %s273 = smul.u32 16, %s25
        %p274 = scmp.lt.s32.totalorder %s273, 15
        %s275 = scalar_select %p274, %s273, 15
        %s276 = smul.addr %s275, 8
        %s277 = scalar_lea.vmem %s6, %s276
        %s278 = smul.u32 16, %s25
      $region24: #{scorer_forward.1} parent=11 // pred_fallthru
        _
    $region12: #{scorer_forward.1} parent=5 // pred_fallthru
      _
    %p279 = scmp.lt.s32.totalorder %s13, 2
    // Predicated region
    $region25: #{scorer_forward.1} parent=5 // pred_check
      %p280 = pneg %p279
    $region26: #{scorer_forward.1} parent=5 // pred_check_branch
      %282 = sbr.rel (%p280) target = $region28
    $region27: #{scorer_forward.1} parent=5 // pred_region
      // Predicated region
      $region29: #{scorer_forward.1} parent=27 // pred_check
        %p283 = pneg %p54
      $region30: #{scorer_forward.1} parent=27 // pred_check_branch
        %285 = sbr.rel (%p283) target = $region32
      $region31: #{scorer_forward.1} parent=27 // pred_region
        %s286 = smul.u32 2, %s21
        %p287 = scmp.lt.s32.totalorder %s20, 1
        %s288 = scalar_select %p287, %s20, 1
        %p289 = scmp.lt.s32.totalorder %s286, 1
        %s290 = scalar_select %p289, %s286, 1
        %s291 = smul.addr %s288, 2
        %s292 = sadd.s32 %s290, %s291
        %s293 = smul.addr %s292, 8
        %s294 = scalar_lea.vmem %s0, %s293
        %s295 = smul.u32 2, %s21
      $region32: #{scorer_forward.1} parent=27 // pred_fallthru
        _
      // Predicated region
      $region33: #{scorer_forward.1} parent=27 // pred_check
        %p296 = pneg %p80
      $region34: #{scorer_forward.1} parent=27 // pred_check_branch
        %298 = sbr.rel (%p296) target = $region36
      $region35: #{scorer_forward.1} parent=27 // pred_region
        %p299 = scmp.lt.s32.totalorder %s20, 1
        %s300 = scalar_select %p299, %s20, 1
        %s301 = smul.addr %s300, 8
        %s302 = scalar_lea.vmem %s1, %s301
      $region36: #{scorer_forward.1} parent=27 // pred_fallthru
        _
      // Predicated region
      $region37: #{scorer_forward.1} parent=27 // pred_check
        %p303 = pneg %p110
      $region38: #{scorer_forward.1} parent=27 // pred_check_branch
        %305 = sbr.rel (%p303) target = $region40
      $region39: #{scorer_forward.1} parent=27 // pred_region
        %s306 = smul.u32 2, %s21
        %p307 = scmp.lt.s32.totalorder %s20, 1
        %s308 = scalar_select %p307, %s20, 1
        %p309 = scmp.lt.s32.totalorder %s306, 1
        %s310 = scalar_select %p309, %s306, 1
        %p311 = scmp.lt.s32.totalorder %s22, 0
        %s312 = scalar_select %p311, %s22, 0
        %s313 = sadd.s32 %s312, %s310
        %s314 = smul.addr %s308, 2
        %s315 = sadd.s32 %s313, %s314
        %s316 = smul.addr %s315, 8
        %s317 = scalar_lea.vmem %s2, %s316
        %s318 = smul.u32 2, %s21
      $region40: #{scorer_forward.1} parent=27 // pred_fallthru
        _
      // Predicated region
      $region41: #{scorer_forward.1} parent=27 // pred_check
        %p319 = pneg %p138
      $region42: #{scorer_forward.1} parent=27 // pred_check_branch
        %321 = sbr.rel (%p319) target = $region44
      $region43: #{scorer_forward.1} parent=27 // pred_region
        %p322 = scmp.lt.s32.totalorder %s20, 1
        %s323 = scalar_select %p322, %s20, 1
        %p324 = scmp.lt.s32.totalorder %s22, 0
        %s325 = scalar_select %p324, %s22, 0
        %s326 = sadd.s32 %s325, %s323
        %s327 = smul.addr %s326, 8
        %s328 = scalar_lea.vmem %s3, %s327
      $region44: #{scorer_forward.1} parent=27 // pred_fallthru
        _
    $region28: #{scorer_forward.1} parent=5 // pred_fallthru
      _
    %p329 = scmp.le.s32.totalorder 1, %s13
    %p330 = scmp.lt.s32.totalorder %s13, 3
    %p331 = pnand %p329, %p330
    %p332 = pneg %p331
    // Predicated region
    $region45: #{scorer_forward.1} parent=5 // pred_check
      _
    $region46: #{scorer_forward.1} parent=5 // pred_check_branch
      %334 = sbr.rel (%p331) target = $region48
    $region47: #{scorer_forward.1} parent=5 // pred_region
      %s335 = ssub.s32 %s13, 1
      %s336 = smul.u32 2, %s24
      %p337 = scmp.lt.s32.totalorder %s23, 1
      %s338 = scalar_select %p337, %s23, 1
      %p339 = scmp.lt.s32.totalorder %s336, 1
      %s340 = scalar_select %p339, %s336, 1
      %s341 = smul.addr %s338, 2
      %s342 = sadd.s32 %s340, %s341
      %s343 = smul.addr %s342, 8
      %s344 = scalar_lea.vmem %s0, %s343
      %p345 = pneg %p60
      %p346 = pneg %p57
      %p347 = scmp.lt.s32.totalorder %s23, 1
      %s348 = scalar_select %p347, %s23, 1
      %s349 = smul.addr %s348, 8
      %s350 = scalar_lea.vmem %s1, %s349
      %p351 = pneg %p86
      %p352 = pneg %p83
      %s353 = smul.u32 2, %s24
      %p354 = scmp.lt.s32.totalorder %s23, 1
      %s355 = scalar_select %p354, %s23, 1
      %p356 = scmp.lt.s32.totalorder %s353, 1
      %s357 = scalar_select %p356, %s353, 1
      %p358 = scmp.lt.s32.totalorder %s25, 0
      %s359 = scalar_select %p358, %s25, 0
      %s360 = sadd.s32 %s359, %s357
      %s361 = smul.addr %s355, 2
      %s362 = sadd.s32 %s360, %s361
      %s363 = smul.addr %s362, 8
      %s364 = scalar_lea.vmem %s2, %s363
      %p365 = pneg %p116
      %p366 = pneg %p113
      %p367 = scmp.lt.s32.totalorder %s23, 1
      %s368 = scalar_select %p367, %s23, 1
      %p369 = scmp.lt.s32.totalorder %s25, 0
      %s370 = scalar_select %p369, %s25, 0
      %s371 = sadd.s32 %s370, %s368
      %s372 = smul.addr %s371, 8
      %s373 = scalar_lea.vmem %s3, %s372
      %p374 = pneg %p144
      %p375 = pneg %p141
      %p376 = pneg %p165
      %p377 = pneg %p162
      %p378 = scmp.lt.s32.totalorder %s25, 0
      %s379 = scalar_select %p378, %s25, 0
      %s380 = smul.addr %s379, 8
      %s381 = scalar_lea.vmem %s5, %s380
      %p382 = pneg %p191
      %p383 = pneg %p188
      %s384 = smul.u32 16, %s25
      %p385 = scmp.lt.s32.totalorder %s384, 15
      %s386 = scalar_select %p385, %s384, 15
      %s387 = smul.addr %s386, 8
      %s388 = scalar_lea.vmem %s6, %s387
      %p389 = pneg %p217
      %p390 = pneg %p214
      %p391 = pneg %p245
      %p392 = pneg %p242
      %p393 = scmp.lt.s32.totalorder %s23, 1
      %s394 = scalar_select %p393, %s23, 1
      %p395 = scmp.lt.s32.totalorder %s24, 0
      %s396 = scalar_select %p395, %s24, 0
      %s397 = smul.addr %s396, 16
      %s398 = smul.addr %s394, 16
      %s399 = sadd.s32 %s397, %s398
      %s400 = smul.addr %s399, 8
      %s401 = scalar_lea.vmem %s7, %s400
      %s402 = smul.u32 2, %s24
      %p403 = scmp.lt.s32.totalorder %s23, 1
      %s404 = scalar_select %p403, %s23, 1
      %p405 = scmp.lt.s32.totalorder %s402, 1
      %s406 = scalar_select %p405, %s402, 1
      %s407 = smul.addr %s404, 2
      %s408 = sadd.s32 %s406, %s407
      %s409 = smul.addr %s408, 8
      %s410 = scalar_lea.vmem %s0, %s409
      %s411 = smul.u32 2, %s24
      %p412 = scmp.lt.s32.totalorder %s23, 1
      %s413 = scalar_select %p412, %s23, 1
      %s414 = smul.addr %s413, 8
      %s415 = scalar_lea.vmem %s1, %s414
      %s416 = smul.u32 2, %s24
      %p417 = scmp.lt.s32.totalorder %s23, 1
      %s418 = scalar_select %p417, %s23, 1
      %p419 = scmp.lt.s32.totalorder %s416, 1
      %s420 = scalar_select %p419, %s416, 1
      %p421 = scmp.lt.s32.totalorder %s25, 0
      %s422 = scalar_select %p421, %s25, 0
      %s423 = sadd.s32 %s422, %s420
      %s424 = smul.addr %s418, 2
      %s425 = sadd.s32 %s423, %s424
      %s426 = smul.addr %s425, 8
      %s427 = scalar_lea.vmem %s2, %s426
      %s428 = smul.u32 2, %s24
      %p429 = scmp.lt.s32.totalorder %s23, 1
      %s430 = scalar_select %p429, %s23, 1
      %p431 = scmp.lt.s32.totalorder %s25, 0
      %s432 = scalar_select %p431, %s25, 0
      %s433 = sadd.s32 %s432, %s430
      %s434 = smul.addr %s433, 8
      %s435 = scalar_lea.vmem %s3, %s434
      %p436 = scmp.lt.s32.totalorder %s25, 0
      %s437 = scalar_select %p436, %s25, 0
      %s438 = smul.addr %s437, 8
      %s439 = scalar_lea.vmem %s5, %s438
      %s440 = smul.u32 16, %s25
      %p441 = scmp.lt.s32.totalorder %s440, 15
      %s442 = scalar_select %p441, %s440, 15
      %s443 = smul.addr %s442, 8
      %s444 = scalar_lea.vmem %s6, %s443
      %s445 = smul.u32 16, %s25
      %p446 = scmp.lt.s32.totalorder %s23, 1
      %s447 = scalar_select %p446, %s23, 1
      %p448 = scmp.lt.s32.totalorder %s24, 0
      %s449 = scalar_select %p448, %s24, 0
      %s450 = smul.addr %s449, 16
      %s451 = smul.addr %s447, 16
      %s452 = sadd.s32 %s450, %s451
      %s453 = smul.addr %s452, 8
      %s454 = scalar_lea.vmem %s7, %s453
      %v455 = vld [vmem:[%s410] sm:$0xff]
      %v456 = vld [vmem:[%s410 + $0x8] sm:$0xff]
      %v457 = vld [vmem:[%s415] sm:$0xff]
      %v460 = vrot.slane %v455, 1
      %v461 = vrot.slane %v455, 2
      %v462 = vrot.slane %v455, 3
      %v463 = vrot.slane %v455, 4
      %v464 = vrot.slane %v455, 5
      %v465 = vrot.slane %v455, 6
      %v466 = vrot.slane %v455, 7
      %v467 = vrot.slane %v456, 1
      %v468 = vrot.slane %v456, 2
      %v469 = vrot.slane %v456, 3
      %v470 = vrot.slane %v456, 4
      %v471 = vrot.slane %v456, 5
      %v472 = vrot.slane %v456, 6
      %v473 = vrot.slane %v456, 7
      %v474 = vperm.slane %v455, 0
      %v475 = vperm.slane %v460, 0
      %v476 = vperm.slane %v461, 0
      %v477 = vperm.slane %v462, 0
      %v478 = vperm.slane %v463, 0
      %v479 = vperm.slane %v464, 0
      %v480 = vperm.slane %v465, 0
      %v481 = vperm.slane %v466, 0
      %v482 = vperm.slane %v456, 0
      %v483 = vperm.slane %v467, 0
      %v484 = vperm.slane %v468, 0
      %v485 = vperm.slane %v469, 0
      %v486 = vperm.slane %v470, 0
      %v487 = vperm.slane %v471, 0
      %v488 = vperm.slane %v472, 0
      %v489 = vperm.slane %v473, 0
      %v506 = vmul.f32 %v474, %v457
      %v507 = vmul.f32 %v475, %v457
      %v508 = vmul.f32 %v476, %v457
      %v509 = vmul.f32 %v477, %v457
      %v510 = vmul.f32 %v478, %v457
      %v511 = vmul.f32 %v479, %v457
      %v512 = vmul.f32 %v480, %v457
      %v513 = vmul.f32 %v481, %v457
      %v514 = vmul.f32 %v482, %v457
      %v515 = vmul.f32 %v483, %v457
      %v516 = vmul.f32 %v484, %v457
      %v517 = vmul.f32 %v485, %v457
      %v518 = vmul.f32 %v486, %v457
      %v519 = vmul.f32 %v487, %v457
      %v520 = vmul.f32 %v488, %v457
      %v521 = vmul.f32 %v489, %v457
      %v522 = vld [vmem:[%s439] sm:$0xff]
      %v523 = vld [vmem:[%s439 + $0x8] sm:$0xff]
      %v524 = vld [vmem:[%s439 + $0x10] sm:$0xff]
      %v525 = vld [vmem:[%s439 + $0x18] sm:$0xff]
      %vm526 = vcmask 261120
      %v528 = vsel %vm526, %v506, 0
      %v531 = vsel %vm526, %v507, 0
      %v534 = vsel %vm526, %v508, 0
      %v537 = vsel %vm526, %v509, 0
      %v540 = vsel %vm526, %v510, 0
      %v543 = vsel %vm526, %v511, 0
      %v546 = vsel %vm526, %v512, 0
      %v549 = vsel %vm526, %v513, 0
      %v552 = vsel %vm526, %v514, 0
      %v555 = vsel %vm526, %v515, 0
      %v558 = vsel %vm526, %v516, 0
      %v561 = vsel %vm526, %v517, 0
      %v564 = vsel %vm526, %v518, 0
      %v567 = vsel %vm526, %v519, 0
      %v570 = vsel %vm526, %v520, 0
      %v573 = vsel %vm526, %v521, 0
      %575 = vmatpush.msra.mxu0 0.0
      %576 = vmatpush.msra.mxu0 0.0
      %577 = vmatpush.msra.mxu0 0.0
      %578 = vmatpush.msra.mxu0 0.0
      %579 = vmatpush.msra.mxu0 0.0
      %580 = vmatpush.msra.mxu0 0.0
      %581 = vmatpush.msra.mxu0 0.0
      %582 = vmatpush.msra.mxu0 0.0
      %583 = vmatpush.msra.mxu0 0.0
      %584 = vmatpush.msra.mxu0 0.0
      %585 = vmatpush.msra.mxu0 0.0
      %586 = vmatpush.msra.mxu0 0.0
      %587 = vmatpush.msra.mxu0 %v525
      %588 = vmatpush.msra.mxu0 %v524
      %589 = vmatpush.msra.mxu0 %v523
      %590 = vmatpush.msra.mxu0 %v522
      %591 = vmatmul.f32.gmra.mxu0 %v528
      %v592 = vpop.f32.mrf.mxu0
      %v593 = vadd.f32 0.0, %v592
      %594 = vmatmul.f32.gmra.mxu0 %v531
      %v595 = vpop.f32.mrf.mxu0
      %v596 = vadd.f32 0.0, %v595
      %597 = vmatmul.f32.gmra.mxu0 %v534
      %v598 = vpop.f32.mrf.mxu0
      %v599 = vadd.f32 0.0, %v598
      %600 = vmatmul.f32.gmra.mxu0 %v537
      %v601 = vpop.f32.mrf.mxu0
      %v602 = vadd.f32 0.0, %v601
      %603 = vmatmul.f32.gmra.mxu0 %v540
      %v604 = vpop.f32.mrf.mxu0
      %v605 = vadd.f32 0.0, %v604
      %606 = vmatmul.f32.gmra.mxu0 %v543
      %v607 = vpop.f32.mrf.mxu0
      %v608 = vadd.f32 0.0, %v607
      %609 = vmatmul.f32.gmra.mxu0 %v546
      %v610 = vpop.f32.mrf.mxu0
      %v611 = vadd.f32 0.0, %v610
      %612 = vmatmul.f32.gmra.mxu0 %v549
      %v613 = vpop.f32.mrf.mxu0
      %v614 = vadd.f32 0.0, %v613
      %615 = vmatmul.f32.gmra.mxu0 %v552
      %v616 = vpop.f32.mrf.mxu0
      %v617 = vadd.f32 0.0, %v616
      %618 = vmatmul.f32.gmra.mxu0 %v555
      %v619 = vpop.f32.mrf.mxu0
      %v620 = vadd.f32 0.0, %v619
      %621 = vmatmul.f32.gmra.mxu0 %v558
      %v622 = vpop.f32.mrf.mxu0
      %v623 = vadd.f32 0.0, %v622
      %624 = vmatmul.f32.gmra.mxu0 %v561
      %v625 = vpop.f32.mrf.mxu0
      %v626 = vadd.f32 0.0, %v625
      %627 = vmatmul.f32.gmra.mxu0 %v564
      %v628 = vpop.f32.mrf.mxu0
      %v629 = vadd.f32 0.0, %v628
      %630 = vmatmul.f32.gmra.mxu0 %v567
      %v631 = vpop.f32.mrf.mxu0
      %v632 = vadd.f32 0.0, %v631
      %633 = vmatmul.f32.gmra.mxu0 %v570
      %v634 = vpop.f32.mrf.mxu0
      %v635 = vadd.f32 0.0, %v634
      %636 = vmatmul.f32.gmra.mxu0 %v573
      %v637 = vpop.f32.mrf.mxu0
      %v638 = vadd.f32 0.0, %v637
      %639 = vdwg.mxu0
      %v640 = vld [vmem:[%s427] sm:$0xff]
      %v641 = vld [vmem:[%s427 + $0x8] sm:$0xff]
      %v644 = vrot.slane %v640, 1
      %v645 = vrot.slane %v640, 2
      %v646 = vrot.slane %v640, 3
      %v647 = vrot.slane %v640, 4
      %v648 = vrot.slane %v640, 5
      %v649 = vrot.slane %v640, 6
      %v650 = vrot.slane %v640, 7
      %v651 = vrot.slane %v641, 1
      %v652 = vrot.slane %v641, 2
      %v653 = vrot.slane %v641, 3
      %v654 = vrot.slane %v641, 4
      %v655 = vrot.slane %v641, 5
      %v656 = vrot.slane %v641, 6
      %v657 = vrot.slane %v641, 7
      %v658 = vperm.slane %v640, 0
      %v659 = vperm.slane %v644, 0
      %v660 = vperm.slane %v645, 0
      %v661 = vperm.slane %v646, 0
      %v662 = vperm.slane %v647, 0
      %v663 = vperm.slane %v648, 0
      %v664 = vperm.slane %v649, 0
      %v665 = vperm.slane %v650, 0
      %v666 = vperm.slane %v641, 0
      %v667 = vperm.slane %v651, 0
      %v668 = vperm.slane %v652, 0
      %v669 = vperm.slane %v653, 0
      %v670 = vperm.slane %v654, 0
      %v671 = vperm.slane %v655, 0
      %v672 = vperm.slane %v656, 0
      %v673 = vperm.slane %v657, 0
      %v690 = vadd.f32 %v593, %v658
      %v691 = vadd.f32 %v596, %v659
      %v692 = vadd.f32 %v599, %v660
      %v693 = vadd.f32 %v602, %v661
      %v694 = vadd.f32 %v605, %v662
      %v695 = vadd.f32 %v608, %v663
      %v696 = vadd.f32 %v611, %v664
      %v697 = vadd.f32 %v614, %v665
      %v698 = vadd.f32 %v617, %v666
      %v699 = vadd.f32 %v620, %v667
      %v700 = vadd.f32 %v623, %v668
      %v701 = vadd.f32 %v626, %v669
      %v702 = vadd.f32 %v629, %v670
      %v703 = vadd.f32 %v632, %v671
      %v704 = vadd.f32 %v635, %v672
      %v705 = vadd.f32 %v638, %v673
      %v706 = vld [vmem:[%s435] sm:$0xff]
      %v707 = vadd.f32 %v690, %v706
      %v708 = vadd.f32 %v691, %v706
      %v709 = vadd.f32 %v692, %v706
      %v710 = vadd.f32 %v693, %v706
      %v711 = vadd.f32 %v694, %v706
      %v712 = vadd.f32 %v695, %v706
      %v713 = vadd.f32 %v696, %v706
      %v714 = vadd.f32 %v697, %v706
      %v715 = vadd.f32 %v698, %v706
      %v716 = vadd.f32 %v699, %v706
      %v717 = vadd.f32 %v700, %v706
      %v718 = vadd.f32 %v701, %v706
      %v719 = vadd.f32 %v702, %v706
      %v720 = vadd.f32 %v703, %v706
      %v721 = vadd.f32 %v704, %v706
      %v722 = vadd.f32 %v705, %v706
      %v723 = vmax.f32 %v707, 0.0
      %v724 = vmax.f32 %v708, 0.0
      %v725 = vmax.f32 %v709, 0.0
      %v726 = vmax.f32 %v710, 0.0
      %v727 = vmax.f32 %v711, 0.0
      %v728 = vmax.f32 %v712, 0.0
      %v729 = vmax.f32 %v713, 0.0
      %v730 = vmax.f32 %v714, 0.0
      %v731 = vmax.f32 %v715, 0.0
      %v732 = vmax.f32 %v716, 0.0
      %v733 = vmax.f32 %v717, 0.0
      %v734 = vmax.f32 %v718, 0.0
      %v735 = vmax.f32 %v719, 0.0
      %v736 = vmax.f32 %v720, 0.0
      %v737 = vmax.f32 %v721, 0.0
      %v738 = vmax.f32 %v722, 0.0
      %v739 = vld [vmem:[%s444] sm:$0xff]
      %v740 = vld [vmem:[%s444 + $0x8] sm:$0xff]
      %v741 = vld [vmem:[%s444 + $0x10] sm:$0xff]
      %v742 = vld [vmem:[%s444 + $0x18] sm:$0xff]
      %v743 = vld [vmem:[%s444 + $0x20] sm:$0xff]
      %v744 = vld [vmem:[%s444 + $0x28] sm:$0xff]
      %v745 = vld [vmem:[%s444 + $0x30] sm:$0xff]
      %v746 = vld [vmem:[%s444 + $0x38] sm:$0xff]
      %v747 = vld [vmem:[%s444 + $0x40] sm:$0xff]
      %v748 = vld [vmem:[%s444 + $0x48] sm:$0xff]
      %v749 = vld [vmem:[%s444 + $0x50] sm:$0xff]
      %v750 = vld [vmem:[%s444 + $0x58] sm:$0xff]
      %v751 = vld [vmem:[%s444 + $0x60] sm:$0xff]
      %v752 = vld [vmem:[%s444 + $0x68] sm:$0xff]
      %v753 = vld [vmem:[%s444 + $0x70] sm:$0xff]
      %v754 = vld [vmem:[%s444 + $0x78] sm:$0xff]
      %755 = vmatpush.msra.mxu0 %v754
      %756 = vmatpush.msra.mxu0 %v753
      %757 = vmatpush.msra.mxu0 %v752
      %758 = vmatpush.msra.mxu0 %v751
      %759 = vmatpush.msra.mxu0 %v750
      %760 = vmatpush.msra.mxu0 %v749
      %761 = vmatpush.msra.mxu0 %v748
      %762 = vmatpush.msra.mxu0 %v747
      %763 = vmatpush.msra.mxu0 %v746
      %764 = vmatpush.msra.mxu0 %v745
      %765 = vmatpush.msra.mxu0 %v744
      %766 = vmatpush.msra.mxu0 %v743
      %767 = vmatpush.msra.mxu0 %v742
      %768 = vmatpush.msra.mxu0 %v741
      %769 = vmatpush.msra.mxu0 %v740
      %770 = vmatpush.msra.mxu0 %v739
      %771 = vmatmul.f32.gmra.mxu0 %v723
      %v772 = vpop.f32.mrf.mxu0
      %v773 = vadd.f32 0.0, %v772
      %774 = vmatmul.f32.gmra.mxu0 %v724
      %v775 = vpop.f32.mrf.mxu0
      %v776 = vadd.f32 0.0, %v775
      %777 = vmatmul.f32.gmra.mxu0 %v725
      %v778 = vpop.f32.mrf.mxu0
      %v779 = vadd.f32 0.0, %v778
      %780 = vmatmul.f32.gmra.mxu0 %v726
      %v781 = vpop.f32.mrf.mxu0
      %v782 = vadd.f32 0.0, %v781
      %783 = vmatmul.f32.gmra.mxu0 %v727
      %v784 = vpop.f32.mrf.mxu0
      %v785 = vadd.f32 0.0, %v784
      %786 = vmatmul.f32.gmra.mxu0 %v728
      %v787 = vpop.f32.mrf.mxu0
      %v788 = vadd.f32 0.0, %v787
      %789 = vmatmul.f32.gmra.mxu0 %v729
      %v790 = vpop.f32.mrf.mxu0
      %v791 = vadd.f32 0.0, %v790
      %792 = vmatmul.f32.gmra.mxu0 %v730
      %v793 = vpop.f32.mrf.mxu0
      %v794 = vadd.f32 0.0, %v793
      %795 = vmatmul.f32.gmra.mxu0 %v731
      %v796 = vpop.f32.mrf.mxu0
      %v797 = vadd.f32 0.0, %v796
      %798 = vmatmul.f32.gmra.mxu0 %v732
      %v799 = vpop.f32.mrf.mxu0
      %v800 = vadd.f32 0.0, %v799
      %801 = vmatmul.f32.gmra.mxu0 %v733
      %v802 = vpop.f32.mrf.mxu0
      %v803 = vadd.f32 0.0, %v802
      %804 = vmatmul.f32.gmra.mxu0 %v734
      %v805 = vpop.f32.mrf.mxu0
      %v806 = vadd.f32 0.0, %v805
      %807 = vmatmul.f32.gmra.mxu0 %v735
      %v808 = vpop.f32.mrf.mxu0
      %v809 = vadd.f32 0.0, %v808
      %810 = vmatmul.f32.gmra.mxu0 %v736
      %v811 = vpop.f32.mrf.mxu0
      %v812 = vadd.f32 0.0, %v811
      %813 = vmatmul.f32.gmra.mxu0 %v737
      %v814 = vpop.f32.mrf.mxu0
      %v815 = vadd.f32 0.0, %v814
      %816 = vmatmul.f32.gmra.mxu0 %v738
      %v817 = vpop.f32.mrf.mxu0
      %v818 = vadd.f32 0.0, %v817
      %819 = vdwg.mxu0
      %p820 = scmp.eq.s32.totalorder %s25, 0
      // Predicated region
      $region49: #{scorer_forward.1} parent=47 // pred_check
        %p821 = pneg %p820
      $region50: #{scorer_forward.1} parent=47 // pred_check_branch
        %823 = sbr.rel (%p821) target = $region52
      $region51: #{scorer_forward.1} parent=47 // pred_region
        %v824 = vld [vmem:[%s4] sm:$0x1]
        %v826 = vperm.slane %v824, 0
        %vm828 = vcmask 23552
        %829 = vst.msk [vmem:[%s454] sm:$0xff] %vm828, %v826
        %830 = vst.msk [vmem:[%s454 + $0x8] sm:$0xff] %vm828, %v826
        %831 = vst.msk [vmem:[%s454 + $0x10] sm:$0xff] %vm828, %v826
        %832 = vst.msk [vmem:[%s454 + $0x18] sm:$0xff] %vm828, %v826
        %833 = vst.msk [vmem:[%s454 + $0x20] sm:$0xff] %vm828, %v826
        %834 = vst.msk [vmem:[%s454 + $0x28] sm:$0xff] %vm828, %v826
        %835 = vst.msk [vmem:[%s454 + $0x30] sm:$0xff] %vm828, %v826
        %836 = vst.msk [vmem:[%s454 + $0x38] sm:$0xff] %vm828, %v826
        %837 = vst.msk [vmem:[%s454 + $0x40] sm:$0xff] %vm828, %v826
        %838 = vst.msk [vmem:[%s454 + $0x48] sm:$0xff] %vm828, %v826
        %839 = vst.msk [vmem:[%s454 + $0x50] sm:$0xff] %vm828, %v826
        %840 = vst.msk [vmem:[%s454 + $0x58] sm:$0xff] %vm828, %v826
        %841 = vst.msk [vmem:[%s454 + $0x60] sm:$0xff] %vm828, %v826
        %842 = vst.msk [vmem:[%s454 + $0x68] sm:$0xff] %vm828, %v826
        %843 = vst.msk [vmem:[%s454 + $0x70] sm:$0xff] %vm828, %v826
        %844 = vst.msk [vmem:[%s454 + $0x78] sm:$0xff] %vm828, %v826
      $region52: #{scorer_forward.1} parent=47 // pred_fallthru
        _
      %v845 = vld [vmem:[%s454] sm:$0xff]
      %v846 = vld [vmem:[%s454 + $0x8] sm:$0xff]
      %v847 = vld [vmem:[%s454 + $0x10] sm:$0xff]
      %v848 = vld [vmem:[%s454 + $0x18] sm:$0xff]
      %v849 = vld [vmem:[%s454 + $0x20] sm:$0xff]
      %v850 = vld [vmem:[%s454 + $0x28] sm:$0xff]
      %v851 = vld [vmem:[%s454 + $0x30] sm:$0xff]
      %v852 = vld [vmem:[%s454 + $0x38] sm:$0xff]
      %v853 = vld [vmem:[%s454 + $0x40] sm:$0xff]
      %v854 = vld [vmem:[%s454 + $0x48] sm:$0xff]
      %v855 = vld [vmem:[%s454 + $0x50] sm:$0xff]
      %v856 = vld [vmem:[%s454 + $0x58] sm:$0xff]
      %v857 = vld [vmem:[%s454 + $0x60] sm:$0xff]
      %v858 = vld [vmem:[%s454 + $0x68] sm:$0xff]
      %v859 = vld [vmem:[%s454 + $0x70] sm:$0xff]
      %v860 = vld [vmem:[%s454 + $0x78] sm:$0xff]
      %v861 = vadd.f32 %v845, %v773
      %v862 = vadd.f32 %v846, %v776
      %v863 = vadd.f32 %v847, %v779
      %v864 = vadd.f32 %v848, %v782
      %v865 = vadd.f32 %v849, %v785
      %v866 = vadd.f32 %v850, %v788
      %v867 = vadd.f32 %v851, %v791
      %v868 = vadd.f32 %v852, %v794
      %v869 = vadd.f32 %v853, %v797
      %v870 = vadd.f32 %v854, %v800
      %v871 = vadd.f32 %v855, %v803
      %v872 = vadd.f32 %v856, %v806
      %v873 = vadd.f32 %v857, %v809
      %v874 = vadd.f32 %v858, %v812
      %v875 = vadd.f32 %v859, %v815
      %v876 = vadd.f32 %v860, %v818
      %vm877 = vcmask 23552
      %878 = vst.msk [vmem:[%s454] sm:$0xff] %vm877, %v861
      %879 = vst.msk [vmem:[%s454 + $0x8] sm:$0xff] %vm877, %v862
      %880 = vst.msk [vmem:[%s454 + $0x10] sm:$0xff] %vm877, %v863
      %881 = vst.msk [vmem:[%s454 + $0x18] sm:$0xff] %vm877, %v864
      %882 = vst.msk [vmem:[%s454 + $0x20] sm:$0xff] %vm877, %v865
      %883 = vst.msk [vmem:[%s454 + $0x28] sm:$0xff] %vm877, %v866
      %884 = vst.msk [vmem:[%s454 + $0x30] sm:$0xff] %vm877, %v867
      %885 = vst.msk [vmem:[%s454 + $0x38] sm:$0xff] %vm877, %v868
      %886 = vst.msk [vmem:[%s454 + $0x40] sm:$0xff] %vm877, %v869
      %887 = vst.msk [vmem:[%s454 + $0x48] sm:$0xff] %vm877, %v870
      %888 = vst.msk [vmem:[%s454 + $0x50] sm:$0xff] %vm877, %v871
      %889 = vst.msk [vmem:[%s454 + $0x58] sm:$0xff] %vm877, %v872
      %890 = vst.msk [vmem:[%s454 + $0x60] sm:$0xff] %vm877, %v873
      %891 = vst.msk [vmem:[%s454 + $0x68] sm:$0xff] %vm877, %v874
      %892 = vst.msk [vmem:[%s454 + $0x70] sm:$0xff] %vm877, %v875
      %893 = vst.msk [vmem:[%s454 + $0x78] sm:$0xff] %vm877, %v876
      %p894 = scmp.lt.s32.totalorder %s23, 1
      %s895 = scalar_select %p894, %s23, 1
      %p896 = scmp.lt.s32.totalorder %s24, 0
      %s897 = scalar_select %p896, %s24, 0
      %s898 = smul.addr %s897, 16
      %s899 = smul.addr %s895, 16
      %s900 = sadd.s32 %s898, %s899
      %s901 = smul.addr %s900, 8
      %s902 = scalar_lea.vmem %s7, %s901
      // Predicated region
      $region53: #{scorer_forward.1} parent=47 // pred_check
        %p903 = pneg %p242
      $region54: #{scorer_forward.1} parent=47 // pred_check_branch
        %905 = sbr.rel (%p903) target = $region56
      $region55: #{scorer_forward.1} parent=47 // pred_region
        _
      $region56: #{scorer_forward.1} parent=47 // pred_fallthru
        _
    $region48: #{scorer_forward.1} parent=5 // pred_fallthru
      _
    %p906 = scmp.le.s32.totalorder 2, %s13
    // Predicated region
    $region57: #{scorer_forward.1} parent=5 // pred_check
      %p907 = pneg %p906
    $region58: #{scorer_forward.1} parent=5 // pred_check_branch
      %909 = sbr.rel (%p907) target = $region60
    $region59: #{scorer_forward.1} parent=5 // pred_region
      %s910 = ssub.s32 %s13, 2
      // Predicated region
      $region61: #{scorer_forward.1} parent=59 // pred_check
        %p911 = pneg %p248
      $region62: #{scorer_forward.1} parent=59 // pred_check_branch
        %913 = sbr.rel (%p911) target = $region64
      $region63: #{scorer_forward.1} parent=59 // pred_region
        %p914 = scmp.lt.s32.totalorder %s26, 1
        %s915 = scalar_select %p914, %s26, 1
        %p916 = scmp.lt.s32.totalorder %s27, 0
        %s917 = scalar_select %p916, %s27, 0
        %s918 = smul.addr %s917, 16
        %s919 = smul.addr %s915, 16
        %s920 = sadd.s32 %s918, %s919
        %s921 = smul.addr %s920, 8
        %s922 = scalar_lea.vmem %s7, %s921
      $region64: #{scorer_forward.1} parent=59 // pred_fallthru
        _
    $region60: #{scorer_forward.1} parent=5 // pred_fallthru
      _
  $region6: #{scorer_forward.1} parent=0 // loop_footer
    %s17 = sadd.s32 1, %s13
  $region7: #{scorer_forward.1} parent=0 // loop_footer_branch
    %12 = sbr.rel target = $region3
  $region8: #{scorer_forward.1} parent=0 // loop_exit
    _

</llo_original>
